<compile_context>
chip_gen: v7x
topology: tpu7x:2x2x1
jax: 0.10.0
libtpu: 0.0.40
codegen_flags: <defaults>
</compile_context>

<pallas_src>
import functools

import jax
import jax.numpy as jnp
from jax import lax
from jax.experimental import pallas as pl
from jax.experimental.pallas import tpu as pltpu

NEG_INF = -1e30
VMEM_LIMIT = 48 * 1024 * 1024  # fits v5e/v6e (128 MiB) and v7x (64 MiB) physical VMEM


def _round_up(x, m):
    return (x + m - 1) // m * m


def _pad2(a, rows, cols):
    return jnp.pad(a, ((0, rows - a.shape[0]), (0, cols - a.shape[1])))


# ------------------ Kernel A: projection + attention-logit vectors ------------------
def _proj_kernel(x_ref, w_ref, a_src_ref, a_dst_ref, hw_ref, u_ref, sv_ref):
    # bf16 x bf16 -> f32 accumulation on the MXU.
    hw = jnp.dot(x_ref[...], w_ref[...], preferred_element_type=jnp.float32)    # [TM, C]
    # Target-node term u[i] = <hw[i], a_dst>.
    u_ref[...] = jnp.sum(hw * a_dst_ref[...], axis=-1, keepdims=True)           # [TM, 1]
    # Source-node term, emitted lane-major: sv[0, j] = <hw[j], a_src>.
    sv_ref[...] = lax.dot_general(a_src_ref[...], hw, (((1,), (1,)), ((), ())),
                                  preferred_element_type=jnp.float32)           # [1, TM]
    hw_ref[...] = hw.astype(hw_ref.dtype)                                       # bf16


# Shared masked-softmax + aggregation body (normalization AFTER the matmul).
def _masked_attention(adj_ref, u_ref, sv_ref, hw_ref, b_ref):
    adjf = adj_ref[...].astype(jnp.float32)                       # [TM, Np] {0,1}
    s = u_ref[...] + sv_ref[...]                                  # [TM,1]+[1,Np] -> [TM,Np]
    lrelu = jnp.maximum(s, 0.2 * s)                               # LeakyReLU(0.2)
    m = jnp.max(lrelu, axis=-1, keepdims=True)                    # stability bound (unmasked)
    p = jnp.exp(lrelu - m) * adjf                                 # zero non-edges (no select)
    denom = jnp.sum(p, axis=-1, keepdims=True)
    denom = jnp.where(denom > 0.0, denom, 1.0)                    # guard all-zero (padded) rows
    agg = jnp.dot(p.astype(jnp.bfloat16), hw_ref[...],
                  preferred_element_type=jnp.float32)             # [TM, C]
    # Normalize the small (TM, C) tile instead of the (TM, Np) attention matrix.
    return agg * pl.reciprocal(denom, approx=True) + b_ref[...]


# --- Kernel B1: layer-1 attention + ReLU, fused with the layer-2 projection --------
def _attn_fused_kernel(adj_ref, u_ref, sv_ref, hw_ref, b_ref,
                       w2_ref, a_src2_ref, a_dst2_ref,
                       hw2_ref, u2_ref, sv2_ref):
    h1 = _masked_attention(adj_ref, u_ref, sv_ref, hw_ref, b_ref)               # [TM, Hp]
    # TODO(synk): F.dropout(x, training=self.training) — identity in eval mode.
    h1 = jnp.maximum(h1, 0.0).astype(jnp.bfloat16)                               # ReLU -> bf16
    hw2 = jnp.dot(h1, w2_ref[...], preferred_element_type=jnp.float32)           # [TM, Cp]
    u2_ref[...] = jnp.sum(hw2 * a_dst2_ref[...], axis=-1, keepdims=True)         # [TM, 1]
    sv2_ref[...] = lax.dot_general(a_src2_ref[...], hw2, (((1,), (1,)), ((), ())),
                                   preferred_element_type=jnp.float32)           # [1, TM]
    hw2_ref[...] = hw2.astype(hw2_ref.dtype)                                     # bf16


# --- Kernel B2: layer-2 attention + masked log_softmax over classes ----------------
def _attn_out_kernel(adj_ref, u_ref, sv_ref, hw_ref, b_ref, out_ref, *, nclass):
    out = _masked_attention(adj_ref, u_ref, sv_ref, hw_ref, b_ref)              # [TM, Cp]
    col = lax.broadcasted_iota(jnp.int32, out.shape, 1)
    out = jnp.where(col < nclass, out, NEG_INF)                                  # mask pad cols
    mm = jnp.max(out, axis=-1, keepdims=True)
    z = out - mm
    out_ref[...] = z - jnp.log(jnp.sum(jnp.exp(z), axis=-1, keepdims=True))


def _projection(xp, w, a_src, a_dst, *, tm):
    n_p, f_p = xp.shape
    c_p = w.shape[1]
    return pl.pallas_call(
        _proj_kernel,
        grid=(n_p // tm,),
        in_specs=[
            pl.BlockSpec((tm, f_p), lambda i: (i, 0)),      # x row tile (bf16)
            pl.BlockSpec((f_p, c_p), lambda i: (0, 0)),     # W, resident (bf16)
            pl.BlockSpec((1, c_p), lambda i: (0, 0)),       # a_src
            pl.BlockSpec((1, c_p), lambda i: (0, 0)),       # a_dst
        ],
        out_specs=(
            pl.BlockSpec((tm, c_p), lambda i: (i, 0)),      # hw (bf16)
            pl.BlockSpec((tm, 1), lambda i: (i, 0)),        # u
            pl.BlockSpec((1, tm), lambda i: (0, i)),        # sv (lane-major)
        ),
        out_shape=(
            jax.ShapeDtypeStruct((n_p, c_p), jnp.bfloat16),
            jax.ShapeDtypeStruct((n_p, 1), jnp.float32),
            jax.ShapeDtypeStruct((1, n_p), jnp.float32),
        ),
        compiler_params=pltpu.CompilerParams(
            dimension_semantics=("parallel",),
            vmem_limit_bytes=VMEM_LIMIT),
    )(xp, w, a_src, a_dst)


def _attention_fused(adj, u, sv, hw, b, w2, a_src2, a_dst2, *, tm):
    n_p = adj.shape[0]
    h_p = hw.shape[1]
    c2_p = w2.shape[1]
    return pl.pallas_call(
        _attn_fused_kernel,
        grid=(n_p // tm,),
        in_specs=[
            pl.BlockSpec((tm, n_p), lambda i: (i, 0)),      # adjacency row tile (int8)
            pl.BlockSpec((tm, 1), lambda i: (i, 0)),        # u1 (target term)
            pl.BlockSpec((1, n_p), lambda i: (0, 0)),       # sv1 (source term), resident
            pl.BlockSpec((n_p, h_p), lambda i: (0, 0)),     # hw1, resident (bf16)
            pl.BlockSpec((1, h_p), lambda i: (0, 0)),       # bias1
            pl.BlockSpec((h_p, c2_p), lambda i: (0, 0)),    # W2, resident (bf16)
            pl.BlockSpec((1, c2_p), lambda i: (0, 0)),      # a_src2
            pl.BlockSpec((1, c2_p), lambda i: (0, 0)),      # a_dst2
        ],
        out_specs=(
            pl.BlockSpec((tm, c2_p), lambda i: (i, 0)),     # hw2 (bf16)
            pl.BlockSpec((tm, 1), lambda i: (i, 0)),        # u2
            pl.BlockSpec((1, tm), lambda i: (0, i)),        # sv2 (lane-major)
        ),
        out_shape=(
            jax.ShapeDtypeStruct((n_p, c2_p), jnp.bfloat16),
            jax.ShapeDtypeStruct((n_p, 1), jnp.float32),
            jax.ShapeDtypeStruct((1, n_p), jnp.float32),
        ),
        compiler_params=pltpu.CompilerParams(
            dimension_semantics=("parallel",),
            vmem_limit_bytes=VMEM_LIMIT),
    )(adj, u, sv, hw, b, w2, a_src2, a_dst2)


def _attention_out(adj, u, sv, hw, b, *, nclass, tm):
    n_p = adj.shape[0]
    c_p = hw.shape[1]
    kern = functools.partial(_attn_out_kernel, nclass=nclass)
    return pl.pallas_call(
        kern,
        grid=(n_p // tm,),
        in_specs=[
            pl.BlockSpec((tm, n_p), lambda i: (i, 0)),      # adjacency row tile (int8)
            pl.BlockSpec((tm, 1), lambda i: (i, 0)),        # u2
            pl.BlockSpec((1, n_p), lambda i: (0, 0)),       # sv2, resident
            pl.BlockSpec((n_p, c_p), lambda i: (0, 0)),     # hw2, resident (bf16)
            pl.BlockSpec((1, c_p), lambda i: (0, 0)),       # bias2
        ],
        out_specs=pl.BlockSpec((tm, c_p), lambda i: (i, 0)),
        out_shape=jax.ShapeDtypeStruct((n_p, c_p), jnp.float32),
        compiler_params=pltpu.CompilerParams(
            dimension_semantics=("parallel",),
            vmem_limit_bytes=VMEM_LIMIT),
    )(adj, u, sv, hw, b)


def gat_forward(x, edge_index, params, *, tm=128):
    """x: [N, nfeat] float32, edge_index: [2, E] int32 (row0=source, row1=target)."""
    assert tm % 128 == 0, "row tile must be a multiple of 128 (int8 adj + lane-major sv)"
    N, nfeat = x.shape
    nclass = params["w2"].shape[1]

    n_p = _round_up(max(N, tm), tm)
    f_p = _round_up(nfeat, 128)
    h_p = _round_up(params["w1"].shape[1], 128)
    c_p = _round_up(nclass, 128)

    # bf16 matmul operands (f32 accumulation inside the kernels).
    xp = _pad2(x, n_p, f_p).astype(jnp.bfloat16)
    w1 = _pad2(params["w1"], f_p, h_p).astype(jnp.bfloat16)
    w2 = _pad2(params["w2"], h_p, c_p).astype(jnp.bfloat16)
    as1 = _pad2(params["a_src1"], 1, h_p)
    ad1 = _pad2(params["a_dst1"], 1, h_p)
    b1 = _pad2(params["b1"], 1, h_p)
    as2 = _pad2(params["a_src2"], 1, c_p)
    ad2 = _pad2(params["a_dst2"], 1, c_p)
    b2 = _pad2(params["b2"], 1, c_p)

    # Glue: sparse COO indices -> dense {0,1} int8 edge mask with self-loops
    # (equivalent of adj.coalesce().indices() + add_self_loops=True).
    # TODO(synk): for large sparse graphs, replace the dense mask with scalar-prefetched
    #             CSR neighbor lists (PrefetchScalarGridSpec + manual DMA gather).
    src, dst = edge_index[0], edge_index[1]
    idx = jnp.arange(N, dtype=src.dtype)
    adj = (jnp.zeros((n_p, n_p), jnp.int8)
           .at[dst, src].set(jnp.int8(1))
           .at[idx, idx].set(jnp.int8(1)))

    # Layer 1 projection, then layer-1 attention + ReLU fused with the layer-2 projection
    # (h1 never leaves VMEM / never hits HBM).
    hw1, u1, sv1 = _projection(xp, w1, as1, ad1, tm=tm)
    hw2, u2, sv2 = _attention_fused(adj, u1, sv1, hw1, b1, w2, as2, ad2, tm=tm)

    # Layer-2 attention + log_softmax over classes (padded class columns masked in-kernel).
    out = _attention_out(adj, u2, sv2, hw2, b2, nclass=nclass, tm=tm)

    return out[:N, :nclass]


def init_params(key, nfeat, nhid, nclass):
    ks = jax.random.split(key, 6)

    def glorot(k, shape):
        fan_in, fan_out = shape[0], shape[-1]
        s = jnp.sqrt(6.0 / (fan_in + fan_out))
        return jax.random.uniform(k, shape, jnp.float32, -s, s)

    return {
        "w1": glorot(ks[0], (nfeat, nhid)),
        "a_src1": glorot(ks[1], (1, nhid)),
        "a_dst1": glorot(ks[2], (1, nhid)),
        "b1": jnp.zeros((1, nhid), jnp.float32),
        "w2": glorot(ks[3], (nhid, nclass)),
        "a_src2": glorot(ks[4], (1, nclass)),
        "a_dst2": glorot(ks[5], (1, nclass)),
        "b2": jnp.zeros((1, nclass), jnp.float32),
    }


if __name__ == "__main__":
    N, NFEAT, NHID, NCLASS = 16, 8, 16, 4

    key = jax.random.PRNGKey(0)
    kx, kp = jax.random.split(key)

    x = jax.random.normal(kx, (N, NFEAT), jnp.float32)

    # Deterministic symmetric ring graph: edges i <-> (i+1) mod N.
    idx = jnp.arange(N, dtype=jnp.int32)
    src = jnp.concatenate([idx, (idx + 1) % N])
    dst = jnp.concatenate([(idx + 1) % N, idx])
    edge_index = jnp.stack([src, dst], axis=0)                       # [2, 2N]

    params = init_params(kp, NFEAT, NHID, NCLASS)

    out = gat_forward(x, edge_index, params)
    out = jax.block_until_ready(out)

    assert out.shape == (N, NCLASS)
    # log_softmax rows must (approximately) exponentiate-sum to 1.
    assert jnp.allclose(jnp.sum(jnp.exp(out), axis=1), 1.0, atol=1e-4)
    print("KERNEL_OK")
</pallas_src>

<mosaic_0001>
module attributes {stable_mosaic.version = 11 : i64} {
  func.func @_proj_kernel(%arg0: i32, %arg1: memref<128x128xbf16, #tpu.memory_space<vmem>>, %arg2: memref<128x128xbf16, #tpu.memory_space<vmem>>, %arg3: memref<1x128xf32, #tpu.memory_space<vmem>>, %arg4: memref<1x128xf32, #tpu.memory_space<vmem>>, %arg5: memref<128x128xbf16, #tpu.memory_space<vmem>>, %arg6: memref<128x1xf32, #tpu.memory_space<vmem>>, %arg7: memref<1x128xf32, #tpu.memory_space<vmem>>) attributes {dimension_semantics = [#tpu.dimension_semantics<parallel>], iteration_bounds = array<i64: 1>, scalar_prefetch = 0 : i64, scratch_operands = 0 : i64, tpu.core_type = #tpu.core_type<tc>, window_params = [{transform_indices = @transform_0, window_bounds = array<i64: 128, 128>}, {pipeline_mode = #tpu.pipeline_mode<synchronous>, transform_indices = @transform_1, window_bounds = array<i64: 128, 128>}, {pipeline_mode = #tpu.pipeline_mode<synchronous>, transform_indices = @transform_2, window_bounds = array<i64: 1, 128>}, {pipeline_mode = #tpu.pipeline_mode<synchronous>, transform_indices = @transform_3, window_bounds = array<i64: 1, 128>}, {transform_indices = @transform_4, window_bounds = array<i64: 128, 128>}, {transform_indices = @transform_5, window_bounds = array<i64: 128, 1>}, {transform_indices = @transform_6, window_bounds = array<i64: 1, 128>}]} {
    %c0 = arith.constant 0 : index
    %c0_0 = arith.constant 0 : index
    %0 = vector.load %arg1[%c0, %c0_0] : memref<128x128xbf16, #tpu.memory_space<vmem>>, vector<128x128xbf16>
    %c0_1 = arith.constant 0 : index
    %c0_2 = arith.constant 0 : index
    %1 = vector.load %arg2[%c0_1, %c0_2] : memref<128x128xbf16, #tpu.memory_space<vmem>>, vector<128x128xbf16>
    %cst = arith.constant dense<0.000000e+00> : vector<128x128xf32>
    %2 = tpu.matmul %0, %1, %cst {dimension_numbers = #tpu.dot_dimension_numbers<[1], [0], [0], [1], [0, 0, 1, 1], [], []>} : vector<128x128xbf16>, vector<128x128xbf16>, vector<128x128xf32> -> vector<128x128xf32>
    %c0_3 = arith.constant 0 : index
    %c0_4 = arith.constant 0 : index
    %3 = vector.load %arg4[%c0_3, %c0_4] : memref<1x128xf32, #tpu.memory_space<vmem>>, vector<1x128xf32>
    %4 = vector.broadcast %3 : vector<1x128xf32> to vector<128x128xf32>
    %5 = arith.mulf %2, %4 : vector<128x128xf32>
    %cst_5 = arith.constant dense<0.000000e+00> : vector<128xf32>
    %6 = vector.multi_reduction <add>, %5, %cst_5 [1] : vector<128x128xf32> to vector<128xf32>
    %7 = vector.shape_cast %6 : vector<128xf32> to vector<128x1xf32>
    %c0_6 = arith.constant 0 : index
    %c0_7 = arith.constant 0 : index
    %8 = vector.load %arg6[%c0_6, %c0_7] : memref<128x1xf32, #tpu.memory_space<vmem>>, vector<128x1xf32>
    tpu.vector_store %arg6[%c0_6, %c0_7], %7 {strides = array<i32>} : memref<128x1xf32, #tpu.memory_space<vmem>>, vector<128x1xf32>,
    %c0_8 = arith.constant 0 : index
    %c0_9 = arith.constant 0 : index
    %9 = vector.load %arg3[%c0_8, %c0_9] : memref<1x128xf32, #tpu.memory_space<vmem>>, vector<1x128xf32>
    %cst_10 = arith.constant dense<0.000000e+00> : vector<1x128xf32>
    %10 = tpu.matmul %9, %2, %cst_10 {dimension_numbers = #tpu.dot_dimension_numbers<[1], [1], [0], [0], [0, 0, 1, 0], [], []>} : vector<1x128xf32>, vector<128x128xf32>, vector<1x128xf32> -> vector<1x128xf32>
    %c0_11 = arith.constant 0 : index
    %c0_12 = arith.constant 0 : index
    %11 = vector.load %arg7[%c0_11, %c0_12] : memref<1x128xf32, #tpu.memory_space<vmem>>, vector<1x128xf32>
    tpu.vector_store %arg7[%c0_11, %c0_12], %10 {strides = array<i32>} : memref<1x128xf32, #tpu.memory_space<vmem>>, vector<1x128xf32>,
    %12 = arith.truncf %2 : vector<128x128xf32> to vector<128x128xbf16>
    %c0_13 = arith.constant 0 : index
    %c0_14 = arith.constant 0 : index
    %13 = vector.load %arg5[%c0_13, %c0_14] : memref<128x128xbf16, #tpu.memory_space<vmem>>, vector<128x128xbf16>
    tpu.vector_store %arg5[%c0_13, %c0_14], %12 {strides = array<i32>} : memref<128x128xbf16, #tpu.memory_space<vmem>>, vector<128x128xbf16>,
    return
  }
  func.func @transform_0(%arg0: i32) -> (i32, i32) {
    %c0_i32 = arith.constant 0 : i32
    %c0_i32_0 = arith.constant 0 : i32
    return %arg0, %c0_i32 : i32, i32
  }
  func.func @transform_1(%arg0: i32) -> (i32, i32) {
    %c0_i32 = arith.constant 0 : i32
    %c0_i32_0 = arith.constant 0 : i32
    %c0_i32_1 = arith.constant 0 : i32
    return %c0_i32, %c0_i32_0 : i32, i32
  }
  func.func @transform_2(%arg0: i32) -> (i32, i32) {
    %c0_i32 = arith.constant 0 : i32
    %c0_i32_0 = arith.constant 0 : i32
    %c0_i32_1 = arith.constant 0 : i32
    return %c0_i32, %c0_i32_0 : i32, i32
  }
  func.func @transform_3(%arg0: i32) -> (i32, i32) {
    %c0_i32 = arith.constant 0 : i32
    %c0_i32_0 = arith.constant 0 : i32
    %c0_i32_1 = arith.constant 0 : i32
    return %c0_i32, %c0_i32_0 : i32, i32
  }
  func.func @transform_4(%arg0: i32) -> (i32, i32) {
    %c0_i32 = arith.constant 0 : i32
    %c0_i32_0 = arith.constant 0 : i32
    return %arg0, %c0_i32 : i32, i32
  }
  func.func @transform_5(%arg0: i32) -> (i32, i32) {
    %c0_i32 = arith.constant 0 : i32
    %c0_i32_0 = arith.constant 0 : i32
    return %arg0, %c0_i32 : i32, i32
  }
  func.func @transform_6(%arg0: i32) -> (i32, i32) {
    %c0_i32 = arith.constant 0 : i32
    %c0_i32_0 = arith.constant 0 : i32
    return %c0_i32, %arg0 : i32, i32
  }
}

</mosaic_0001>

<llo_original>
// kernel: tpu_custom_call.1
$region0: #{tpu_custom_call.1}
  #allocation0 [shape = 'u32[]', space=smem, size = 0x4, offset = 0x4, fixed_abs, tag = 'smem constant byte address 0x4 - core index']
  #allocation1 [shape = 'u32[144,128]{1,0:T(1,128)}', space=vmem, size = 0x12000, scoped, tag = 'internal scratch']
  %s0 = inlined_call_operand.hbm [shape: bf16[128,128], index: 0, kind: input, shape index: {}]
  %s1 = inlined_call_operand.hbm [shape: bf16[128,128], index: 1, kind: input, shape index: {}]
  %s2 = inlined_call_operand.vmem [shape: f32[1,128], index: 2, kind: input, shape index: {}]
  %s3 = inlined_call_operand.vmem [shape: f32[1,128], index: 3, kind: input, shape index: {}]
  %s4 = inlined_call_operand.hbm [shape: bf16[128,128], index: 4, kind: output, shape index: {0}]
  %s5 = inlined_call_operand.vmem [shape: f32[128,1], index: 5, kind: output, shape index: {1}]
  %s6 = inlined_call_operand.hbm [shape: f32[1,128], index: 6, kind: output, shape index: {2}]
  %7 = xla_tuple %s4, %s5, %s6
  %s8 = sld [smem:[#allocation0]]
  $region50: #{tpu_custom_call.1} parent=0
    _
  %s10 = ssub.s32 1, %s8
  %s11 = scalar_select 0, %s10, %s8
  $region1: #{tpu_custom_call.1} parent=0
    #allocation2 [shape = 'u8[32768]{0}', space=vmem, size = 0x8000, scoped, tag = 'input window, operand 0, single buffered']
    #allocation3 [shape = 's32[1]{0}', space=sflag, size = 0x4, scoped, tag = 'scoped memory for tpu_custom_call.1']
    #allocation4 [shape = 's32[1]{0}', space=sflag, size = 0x4, scoped, tag = 'scoped memory for tpu_custom_call.1']
    #allocation5 [shape = 'u8[32768]{0}', space=vmem, size = 0x8000, scoped, tag = 'input window, operand 1, single buffered']
    #allocation6 [shape = 's32[1]{0}', space=sflag, size = 0x4, scoped, tag = 'scoped memory for tpu_custom_call.1']
    #allocation7 [shape = 'u8[32768]{0}', space=vmem, size = 0x8000, scoped, tag = 'output window, operand 0, single buffered']
    #allocation8 [shape = 'u8[512]{0}', space=vmem, size = 0x400, scoped, tag = 'output window, operand 2, single buffered']
    #allocation9 [shape = 's32[1]{0}', space=sflag, size = 0x4, scoped, tag = 'scoped memory for tpu_custom_call.1']
    %12 = vsyncpa [#allocation3], 0
    %13 = vsyncpa [#allocation6], 0
    %14 = vsyncpa [#allocation4], 0
    %15 = vsyncpa [#allocation9], 0
    // Predicated region
    $region2: #{tpu_custom_call.1} parent=1 // pred_check
      _
    $region3: #{tpu_custom_call.1} parent=1 // pred_check_branch
      %17 = sbr.rel (0) target = $region5
    $region4: #{tpu_custom_call.1} parent=1 // pred_region
      %s19 = ssub.s32 1024, 1024
      %20 = vsyncadd [#allocation3], %s19
      %s21 = sshll.u32 [#allocation2], 4
      %s22 = int_to_ptr.vmem [resolvable:$true] %s21
      %27 = dma.hbm_to_vmem [thread:$0]  %s0, 1024, %s22, [#allocation3], 64, 64, 4
    $region5: #{tpu_custom_call.1} parent=1 // pred_fallthru
      _
    // Predicated region
    $region6: #{tpu_custom_call.1} parent=1 // pred_check
      _
    $region7: #{tpu_custom_call.1} parent=1 // pred_check_branch
      %29 = sbr.rel (0) target = $region9
    $region8: #{tpu_custom_call.1} parent=1 // pred_region
      %s31 = ssub.s32 1024, 1024
      %32 = vsyncadd [#allocation6], %s31
      %s33 = sshll.u32 [#allocation5], 4
      %s34 = int_to_ptr.vmem [resolvable:$true] %s33
      %39 = dma.hbm_to_vmem [thread:$0]  %s1, 1024, %s34, [#allocation6], 64, 64, 4
    $region9: #{tpu_custom_call.1} parent=1 // pred_fallthru
      _
    // Predicated region
    $region10: #{tpu_custom_call.1} parent=1 // pred_check
      _
    $region11: #{tpu_custom_call.1} parent=1 // pred_check_branch
      %41 = sbr.rel (0) target = $region13
    $region12: #{tpu_custom_call.1} parent=1 // pred_region
      _
    $region13: #{tpu_custom_call.1} parent=1 // pred_fallthru
      _
    // Predicated region
    $region14: #{tpu_custom_call.1} parent=1 // pred_check
      _
    $region15: #{tpu_custom_call.1} parent=1 // pred_check_branch
      %43 = sbr.rel (0) target = $region17
    $region16: #{tpu_custom_call.1} parent=1 // pred_region
      _
    $region17: #{tpu_custom_call.1} parent=1 // pred_fallthru
      _
    // Predicated region
    $region18: #{tpu_custom_call.1} parent=1 // pred_check
      _
    $region19: #{tpu_custom_call.1} parent=1 // pred_check_branch
      %45 = sbr.rel (0) target = $region21
    $region20: #{tpu_custom_call.1} parent=1 // pred_region
      %46 = dma.done [#allocation3], 1024
    $region21: #{tpu_custom_call.1} parent=1 // pred_fallthru
      _
    // Predicated region
    $region22: #{tpu_custom_call.1} parent=1 // pred_check
      _
    $region23: #{tpu_custom_call.1} parent=1 // pred_check_branch
      %48 = sbr.rel (0) target = $region25
    $region24: #{tpu_custom_call.1} parent=1 // pred_region
      %49 = dma.done [#allocation6], 1024
    $region25: #{tpu_custom_call.1} parent=1 // pred_fallthru
      _
    %v51 = vld [vmem:[#allocation2] sm:$0xf]
    %v52 = vld [vmem:[#allocation2 + $0x4] sm:$0xf]
    %v53 = vld [vmem:[#allocation2 + $0x8] sm:$0xf]
    %v54 = vld [vmem:[#allocation2 + $0xc] sm:$0xf]
    %v55 = vld [vmem:[#allocation2 + $0x10] sm:$0xf]
    %v56 = vld [vmem:[#allocation2 + $0x14] sm:$0xf]
    %v57 = vld [vmem:[#allocation2 + $0x18] sm:$0xf]
    %v58 = vld [vmem:[#allocation2 + $0x1c] sm:$0xf]
    %v59 = vld [vmem:[#allocation2 + $0x20] sm:$0xf]
    %v60 = vld [vmem:[#allocation2 + $0x24] sm:$0xf]
    %v61 = vld [vmem:[#allocation2 + $0x28] sm:$0xf]
    %v62 = vld [vmem:[#allocation2 + $0x2c] sm:$0xf]
    %v63 = vld [vmem:[#allocation2 + $0x30] sm:$0xf]
    %v64 = vld [vmem:[#allocation2 + $0x34] sm:$0xf]
    %v65 = vld [vmem:[#allocation2 + $0x38] sm:$0xf]
    %v66 = vld [vmem:[#allocation2 + $0x3c] sm:$0xf]
    %v67 = vld [vmem:[#allocation5] sm:$0xf]
    %v68 = vld [vmem:[#allocation5 + $0x4] sm:$0xf]
    %v69 = vld [vmem:[#allocation5 + $0x8] sm:$0xf]
    %v70 = vld [vmem:[#allocation5 + $0xc] sm:$0xf]
    %v71 = vld [vmem:[#allocation5 + $0x10] sm:$0xf]
    %v72 = vld [vmem:[#allocation5 + $0x14] sm:$0xf]
    %v73 = vld [vmem:[#allocation5 + $0x18] sm:$0xf]
    %v74 = vld [vmem:[#allocation5 + $0x1c] sm:$0xf]
    %v75 = vld [vmem:[#allocation5 + $0x20] sm:$0xf]
    %v76 = vld [vmem:[#allocation5 + $0x24] sm:$0xf]
    %v77 = vld [vmem:[#allocation5 + $0x28] sm:$0xf]
    %v78 = vld [vmem:[#allocation5 + $0x2c] sm:$0xf]
    %v79 = vld [vmem:[#allocation5 + $0x30] sm:$0xf]
    %v80 = vld [vmem:[#allocation5 + $0x34] sm:$0xf]
    %v81 = vld [vmem:[#allocation5 + $0x38] sm:$0xf]
    %v82 = vld [vmem:[#allocation5 + $0x3c] sm:$0xf]
    %v99 = vunpack.c.l.b16 %v51
    %v100 = vunpack.c.l.b16 %v52
    %v101 = vunpack.c.l.b16 %v53
    %v102 = vunpack.c.l.b16 %v54
    %v103 = vunpack.c.l.b16 %v55
    %v104 = vunpack.c.l.b16 %v56
    %v105 = vunpack.c.l.b16 %v57
    %v106 = vunpack.c.l.b16 %v58
    %v107 = vunpack.c.l.b16 %v59
    %v108 = vunpack.c.l.b16 %v60
    %v109 = vunpack.c.l.b16 %v61
    %v110 = vunpack.c.l.b16 %v62
    %v111 = vunpack.c.l.b16 %v63
    %v112 = vunpack.c.l.b16 %v64
    %v113 = vunpack.c.l.b16 %v65
    %v114 = vunpack.c.l.b16 %v66
    %v115 = vpack.c.b16 %v100, %v99
    %v116 = vpack.c.b16 %v102, %v101
    %v117 = vpack.c.b16 %v104, %v103
    %v118 = vpack.c.b16 %v106, %v105
    %v119 = vpack.c.b16 %v108, %v107
    %v120 = vpack.c.b16 %v110, %v109
    %v121 = vpack.c.b16 %v112, %v111
    %v122 = vpack.c.b16 %v114, %v113
    %v147 = vunpack.c.l.b16 %v67
    %v148 = vunpack.c.l.b16 %v68
    %v149 = vunpack.c.l.b16 %v69
    %v150 = vunpack.c.l.b16 %v70
    %v151 = vunpack.c.l.b16 %v71
    %v152 = vunpack.c.l.b16 %v72
    %v153 = vunpack.c.l.b16 %v73
    %v154 = vunpack.c.l.b16 %v74
    %v155 = vunpack.c.l.b16 %v75
    %v156 = vunpack.c.l.b16 %v76
    %v157 = vunpack.c.l.b16 %v77
    %v158 = vunpack.c.l.b16 %v78
    %v159 = vunpack.c.l.b16 %v79
    %v160 = vunpack.c.l.b16 %v80
    %v161 = vunpack.c.l.b16 %v81
    %v162 = vunpack.c.l.b16 %v82
    %v163 = vpack.c.b16 %v148, %v147
    %v164 = vpack.c.b16 %v150, %v149
    %v165 = vpack.c.b16 %v152, %v151
    %v166 = vpack.c.b16 %v154, %v153
    %v167 = vpack.c.b16 %v156, %v155
    %v168 = vpack.c.b16 %v158, %v157
    %v169 = vpack.c.b16 %v160, %v159
    %v170 = vpack.c.b16 %v162, %v161
    %179 = vmatprep.subr.bf16.mxu0 0
    %180 = vmatpush1.bf16.msra.mxu0 %v163
    %181 = vmatprep.subr.bf16.mxu0 0
    %182 = vmatpush1.bf16.msra.mxu0 %v164
    %183 = vmatprep.subr.bf16.mxu0 0
    %184 = vmatpush1.bf16.msra.mxu0 %v165
    %185 = vmatprep.subr.bf16.mxu0 0
    %186 = vmatpush1.bf16.msra.mxu0 %v166
    %187 = vmatprep.subr.bf16.mxu0 0
    %188 = vmatpush1.bf16.msra.mxu0 %v167
    %189 = vmatprep.subr.bf16.mxu0 0
    %190 = vmatpush1.bf16.msra.mxu0 %v168
    %191 = vmatprep.subr.bf16.mxu0 0
    %192 = vmatpush1.bf16.msra.mxu0 %v169
    %193 = vmatprep.subr.bf16.mxu0 0
    %194 = vmatpush1.bf16.msra.mxu0 %v170
    %195 = vmatprep.subr.bf16.mxu0 0
    %196 = vmatpush1.bf16.msra.mxu0 0
    %197 = vmatprep.subr.bf16.mxu0 0
    %198 = vmatpush1.bf16.msra.mxu0 0
    %199 = vmatprep.subr.bf16.mxu0 0
    %200 = vmatpush1.bf16.msra.mxu0 0
    %201 = vmatprep.subr.bf16.mxu0 0
    %202 = vmatpush1.bf16.msra.mxu0 0
    %203 = vmatprep.subr.bf16.mxu0 0
    %204 = vmatpush1.bf16.msra.mxu0 0
    %205 = vmatprep.subr.bf16.mxu0 0
    %206 = vmatpush1.bf16.msra.mxu0 0
    %207 = vmatprep.subr.bf16.mxu0 0
    %208 = vmatpush1.bf16.msra.mxu0 0
    %209 = vmatprep.subr.bf16.mxu0 0
    %210 = vmatpush1.bf16.msra.mxu0 0
    %211 = vmatprep.mubr.bf16.mxu0 0
    %212 = vmatmul.mubr.bf16.gmra.mrb[0].mxu0 %v115
    %v213 = vpop.f32.mrb[0].mxu0
    %v214 = vadd.f32 0.0, %v213
    %v215 = vpop.f32.mrb[0].mxu0
    %v216 = vpop.f32.mrb[0].mxu0
    %v217 = vadd.f32 0.0, %v216
    %v218 = vpop.f32.mrb[0].mxu0
    %219 = vmatprep.mubr.bf16.mxu0 0
    %220 = vmatmul.mubr.bf16.gmra.mrb[0].mxu0 %v116
    %v221 = vpop.f32.mrb[0].mxu0
    %v222 = vadd.f32 0.0, %v221
    %v223 = vpop.f32.mrb[0].mxu0
    %v224 = vpop.f32.mrb[0].mxu0
    %v225 = vadd.f32 0.0, %v224
    %v226 = vpop.f32.mrb[0].mxu0
    %227 = vmatprep.mubr.bf16.mxu0 0
    %228 = vmatmul.mubr.bf16.gmra.mrb[0].mxu0 %v117
    %v229 = vpop.f32.mrb[0].mxu0
    %v230 = vadd.f32 0.0, %v229
    %v231 = vpop.f32.mrb[0].mxu0
    %v232 = vpop.f32.mrb[0].mxu0
    %v233 = vadd.f32 0.0, %v232
    %v234 = vpop.f32.mrb[0].mxu0
    %235 = vmatprep.mubr.bf16.mxu0 0
    %236 = vmatmul.mubr.bf16.gmra.mrb[0].mxu0 %v118
    %v237 = vpop.f32.mrb[0].mxu0
    %v238 = vadd.f32 0.0, %v237
    %v239 = vpop.f32.mrb[0].mxu0
    %v240 = vpop.f32.mrb[0].mxu0
    %v241 = vadd.f32 0.0, %v240
    %v242 = vpop.f32.mrb[0].mxu0
    %243 = vmatprep.mubr.bf16.mxu0 0
    %244 = vmatmul.mubr.bf16.gmra.mrb[0].mxu0 %v119
    %v245 = vpop.f32.mrb[0].mxu0
    %v246 = vadd.f32 0.0, %v245
    %v247 = vpop.f32.mrb[0].mxu0
    %v248 = vpop.f32.mrb[0].mxu0
    %v249 = vadd.f32 0.0, %v248
    %v250 = vpop.f32.mrb[0].mxu0
    %251 = vmatprep.mubr.bf16.mxu0 0
    %252 = vmatmul.mubr.bf16.gmra.mrb[0].mxu0 %v120
    %v253 = vpop.f32.mrb[0].mxu0
    %v254 = vadd.f32 0.0, %v253
    %v255 = vpop.f32.mrb[0].mxu0
    %v256 = vpop.f32.mrb[0].mxu0
    %v257 = vadd.f32 0.0, %v256
    %v258 = vpop.f32.mrb[0].mxu0
    %259 = vmatprep.mubr.bf16.mxu0 0
    %260 = vmatmul.mubr.bf16.gmra.mrb[0].mxu0 %v121
    %v261 = vpop.f32.mrb[0].mxu0
    %v262 = vadd.f32 0.0, %v261
    %v263 = vpop.f32.mrb[0].mxu0
    %v264 = vpop.f32.mrb[0].mxu0
    %v265 = vadd.f32 0.0, %v264
    %v266 = vpop.f32.mrb[0].mxu0
    %267 = vmatprep.mubr.bf16.mxu0 0
    %268 = vmatmul.mubr.bf16.gmra.mrb[0].mxu0 %v122
    %v269 = vpop.f32.mrb[0].mxu0
    %v270 = vadd.f32 0.0, %v269
    %v271 = vpop.f32.mrb[0].mxu0
    %v272 = vpop.f32.mrb[0].mxu0
    %v273 = vadd.f32 0.0, %v272
    %v274 = vpop.f32.mrb[0].mxu0
    %275 = vdwg.mxu0
    %v276 = vld [vmem:[%s3] sm:$0x1]
    %v278 = vlaneseq
    %v279 = vshrl.u32 %v278, 7
    %v280 = vsub.s32 0, %v279
    %v281 = vrot.slane %v276, %v280
    %v283 = vmul.f32 %v214, %v281
    %v284 = vmul.f32 %v217, %v281
    %v285 = vmul.f32 %v222, %v281
    %v286 = vmul.f32 %v225, %v281
    %v287 = vmul.f32 %v230, %v281
    %v288 = vmul.f32 %v233, %v281
    %v289 = vmul.f32 %v238, %v281
    %v290 = vmul.f32 %v241, %v281
    %v291 = vmul.f32 %v246, %v281
    %v292 = vmul.f32 %v249, %v281
    %v293 = vmul.f32 %v254, %v281
    %v294 = vmul.f32 %v257, %v281
    %v295 = vmul.f32 %v262, %v281
    %v296 = vmul.f32 %v265, %v281
    %v297 = vmul.f32 %v270, %v281
    %v298 = vmul.f32 %v273, %v281
    %299 = vadd.xlane.f32.xlu0 %v283
    %v300 = vpop.xlane.xlu0 %299
    %301 = vadd.xlane.f32.xlu0 %v284
    %v302 = vpop.xlane.xlu0 %301
    %303 = vadd.xlane.f32.xlu0 %v285
    %v304 = vpop.xlane.xlu0 %303
    %305 = vadd.xlane.f32.xlu0 %v286
    %v306 = vpop.xlane.xlu0 %305
    %307 = vadd.xlane.f32.xlu0 %v287
    %v308 = vpop.xlane.xlu0 %307
    %309 = vadd.xlane.f32.xlu0 %v288
    %v310 = vpop.xlane.xlu0 %309
    %311 = vadd.xlane.f32.xlu0 %v289
    %v312 = vpop.xlane.xlu0 %311
    %313 = vadd.xlane.f32.xlu0 %v290
    %v314 = vpop.xlane.xlu0 %313
    %315 = vadd.xlane.f32.xlu0 %v291
    %v316 = vpop.xlane.xlu0 %315
    %317 = vadd.xlane.f32.xlu0 %v292
    %v318 = vpop.xlane.xlu0 %317
    %319 = vadd.xlane.f32.xlu0 %v293
    %v320 = vpop.xlane.xlu0 %319
    %321 = vadd.xlane.f32.xlu0 %v294
    %v322 = vpop.xlane.xlu0 %321
    %323 = vadd.xlane.f32.xlu0 %v295
    %v324 = vpop.xlane.xlu0 %323
    %325 = vadd.xlane.f32.xlu0 %v296
    %v326 = vpop.xlane.xlu0 %325
    %327 = vadd.xlane.f32.xlu0 %v297
    %v328 = vpop.xlane.xlu0 %327
    %329 = vadd.xlane.f32.xlu0 %v298
    %v330 = vpop.xlane.xlu0 %329
    %vm331 = vcmask 7168
    %332 = vst.msk [vmem:[%s5] sm:$0xff] %vm331, %v300
    %333 = vst.msk [vmem:[%s5 + $0x8] sm:$0xff] %vm331, %v302
    %334 = vst.msk [vmem:[%s5 + $0x10] sm:$0xff] %vm331, %v304
    %335 = vst.msk [vmem:[%s5 + $0x18] sm:$0xff] %vm331, %v306
    %336 = vst.msk [vmem:[%s5 + $0x20] sm:$0xff] %vm331, %v308
    %337 = vst.msk [vmem:[%s5 + $0x28] sm:$0xff] %vm331, %v310
    %338 = vst.msk [vmem:[%s5 + $0x30] sm:$0xff] %vm331, %v312
    %339 = vst.msk [vmem:[%s5 + $0x38] sm:$0xff] %vm331, %v314
    %340 = vst.msk [vmem:[%s5 + $0x40] sm:$0xff] %vm331, %v316
    %341 = vst.msk [vmem:[%s5 + $0x48] sm:$0xff] %vm331, %v318
    %342 = vst.msk [vmem:[%s5 + $0x50] sm:$0xff] %vm331, %v320
    %343 = vst.msk [vmem:[%s5 + $0x58] sm:$0xff] %vm331, %v322
    %344 = vst.msk [vmem:[%s5 + $0x60] sm:$0xff] %vm331, %v324
    %345 = vst.msk [vmem:[%s5 + $0x68] sm:$0xff] %vm331, %v326
    %346 = vst.msk [vmem:[%s5 + $0x70] sm:$0xff] %vm331, %v328
    %347 = vst.msk [vmem:[%s5 + $0x78] sm:$0xff] %vm331, %v330
    %v348 = vld [vmem:[%s2] sm:$0x1]
    %349 = vmatprep.subr.mxu0 0.0
    %350 = vmatpush1.xpose.msra.mxu0 %v214
    %351 = vmatprep.subr.mxu0 0.0
    %352 = vmatpush1.xpose.msra.mxu0 %v217
    %353 = vmatprep.subr.mxu0 0.0
    %354 = vmatpush1.xpose.msra.mxu0 %v222
    %355 = vmatprep.subr.mxu0 0.0
    %356 = vmatpush1.xpose.msra.mxu0 %v225
    %357 = vmatprep.subr.mxu0 0.0
    %358 = vmatpush1.xpose.msra.mxu0 %v230
    %359 = vmatprep.subr.mxu0 0.0
    %360 = vmatpush1.xpose.msra.mxu0 %v233
    %361 = vmatprep.subr.mxu0 0.0
    %362 = vmatpush1.xpose.msra.mxu0 %v238
    %363 = vmatprep.subr.mxu0 0.0
    %364 = vmatpush1.xpose.msra.mxu0 %v241
    %365 = vmatprep.subr.mxu0 0.0
    %366 = vmatpush1.xpose.msra.mxu0 %v246
    %367 = vmatprep.subr.mxu0 0.0
    %368 = vmatpush1.xpose.msra.mxu0 %v249
    %369 = vmatprep.subr.mxu0 0.0
    %370 = vmatpush1.xpose.msra.mxu0 %v254
    %371 = vmatprep.subr.mxu0 0.0
    %372 = vmatpush1.xpose.msra.mxu0 %v257
    %373 = vmatprep.subr.mxu0 0.0
    %374 = vmatpush1.xpose.msra.mxu0 %v262
    %375 = vmatprep.subr.mxu0 0.0
    %376 = vmatpush1.xpose.msra.mxu0 %v265
    %377 = vmatprep.subr.mxu0 0.0
    %378 = vmatpush1.xpose.msra.mxu0 %v270
    %379 = vmatprep.subr.mxu0 0.0
    %380 = vmatpush1.xpose.msra.mxu0 %v273
    %381 = vmatprep.subr.mxu0 0.0
    %382 = vmatpush1.xpose.msra.mxu0 0.0
    %383 = vmatprep.subr.mxu0 0.0
    %384 = vmatpush1.xpose.msra.mxu0 0.0
    %385 = vmatprep.subr.mxu0 0.0
    %386 = vmatpush1.xpose.msra.mxu0 0.0
    %387 = vmatprep.subr.mxu0 0.0
    %388 = vmatpush1.xpose.msra.mxu0 0.0
    %389 = vmatprep.subr.mxu0 0.0
    %390 = vmatpush1.xpose.msra.mxu0 0.0
    %391 = vmatprep.subr.mxu0 0.0
    %392 = vmatpush1.xpose.msra.mxu0 0.0
    %393 = vmatprep.subr.mxu0 0.0
    %394 = vmatpush1.xpose.msra.mxu0 0.0
    %395 = vmatprep.subr.mxu0 0.0
    %396 = vmatpush1.xpose.msra.mxu0 0.0
    %397 = vmatprep.subr.mxu0 0.0
    %398 = vmatpush1.xpose.msra.mxu0 0.0
    %399 = vmatprep.subr.mxu0 0.0
    %400 = vmatpush1.xpose.msra.mxu0 0.0
    %401 = vmatprep.subr.mxu0 0.0
    %402 = vmatpush1.xpose.msra.mxu0 0.0
    %403 = vmatprep.subr.mxu0 0.0
    %404 = vmatpush1.xpose.msra.mxu0 0.0
    %405 = vmatprep.subr.mxu0 0.0
    %406 = vmatpush1.xpose.msra.mxu0 0.0
    %407 = vmatprep.subr.mxu0 0.0
    %408 = vmatpush1.xpose.msra.mxu0 0.0
    %409 = vmatprep.subr.mxu0 0.0
    %410 = vmatpush1.xpose.msra.mxu0 0.0
    %411 = vmatprep.subr.mxu0 0.0
    %412 = vmatpush1.xpose.msra.mxu0 0.0
    %413 = vmatprep.mubr.f32.mxu0 0.0
    %414 = vmatmul.mubr.f32.gmra.mrb[0].mxu0 %v348
    %v415 = vpop.f32.mrb[0].mxu0
    %v416 = vadd.f32 0.0, %v415
    %v417 = vpop.f32.mrb[0].mxu0
    %418 = vdwg.mxu0
    %419 = vst [vmem:[#allocation8] sm:$0x1] %v416
    %v420 = vpack.c.bf16 %v217, %v214
    %v421 = vpack.c.bf16 %v225, %v222
    %v422 = vpack.c.bf16 %v233, %v230
    %v423 = vpack.c.bf16 %v241, %v238
    %v424 = vpack.c.bf16 %v249, %v246
    %v425 = vpack.c.bf16 %v257, %v254
    %v426 = vpack.c.bf16 %v265, %v262
    %v427 = vpack.c.bf16 %v273, %v270
    %v436 = vunpack.c.l.b16 %v420
    %v437 = vunpack.c.h.b16 %v420
    %v438 = vunpack.c.l.b16 %v421
    %v439 = vunpack.c.h.b16 %v421
    %v440 = vunpack.c.l.b16 %v422
    %v441 = vunpack.c.h.b16 %v422
    %v442 = vunpack.c.l.b16 %v423
    %v443 = vunpack.c.h.b16 %v423
    %v444 = vunpack.c.l.b16 %v424
    %v445 = vunpack.c.h.b16 %v424
    %v446 = vunpack.c.l.b16 %v425
    %v447 = vunpack.c.h.b16 %v425
    %v448 = vunpack.c.l.b16 %v426
    %v449 = vunpack.c.h.b16 %v426
    %v450 = vunpack.c.l.b16 %v427
    %v451 = vunpack.c.h.b16 %v427
    %v452 = vpack.c.b16 %v436, %v436
    %v453 = vpack.c.b16 %v437, %v437
    %v454 = vpack.c.b16 %v438, %v438
    %v455 = vpack.c.b16 %v439, %v439
    %v456 = vpack.c.b16 %v440, %v440
    %v457 = vpack.c.b16 %v441, %v441
    %v458 = vpack.c.b16 %v442, %v442
    %v459 = vpack.c.b16 %v443, %v443
    %v460 = vpack.c.b16 %v444, %v444
    %v461 = vpack.c.b16 %v445, %v445
    %v462 = vpack.c.b16 %v446, %v446
    %v463 = vpack.c.b16 %v447, %v447
    %v464 = vpack.c.b16 %v448, %v448
    %v465 = vpack.c.b16 %v449, %v449
    %v466 = vpack.c.b16 %v450, %v450
    %v467 = vpack.c.b16 %v451, %v451
    %484 = vst [vmem:[#allocation7] sm:$0xf] %v452
    %485 = vst [vmem:[#allocation7 + $0x4] sm:$0xf] %v453
    %486 = vst [vmem:[#allocation7 + $0x8] sm:$0xf] %v454
    %487 = vst [vmem:[#allocation7 + $0xc] sm:$0xf] %v455
    %488 = vst [vmem:[#allocation7 + $0x10] sm:$0xf] %v456
    %489 = vst [vmem:[#allocation7 + $0x14] sm:$0xf] %v457
    %490 = vst [vmem:[#allocation7 + $0x18] sm:$0xf] %v458
    %491 = vst [vmem:[#allocation7 + $0x1c] sm:$0xf] %v459
    %492 = vst [vmem:[#allocation7 + $0x20] sm:$0xf] %v460
    %493 = vst [vmem:[#allocation7 + $0x24] sm:$0xf] %v461
    %494 = vst [vmem:[#allocation7 + $0x28] sm:$0xf] %v462
    %495 = vst [vmem:[#allocation7 + $0x2c] sm:$0xf] %v463
    %496 = vst [vmem:[#allocation7 + $0x30] sm:$0xf] %v464
    %497 = vst [vmem:[#allocation7 + $0x34] sm:$0xf] %v465
    %498 = vst [vmem:[#allocation7 + $0x38] sm:$0xf] %v466
    %499 = vst [vmem:[#allocation7 + $0x3c] sm:$0xf] %v467
    // Predicated region
    $region26: #{tpu_custom_call.1} parent=1 // pred_check
      _
    $region27: #{tpu_custom_call.1} parent=1 // pred_check_branch
      %501 = sbr.rel (0) target = $region29
    $region28: #{tpu_custom_call.1} parent=1 // pred_region
      %s503 = ssub.s32 1024, 1024
      %504 = vsyncadd [#allocation4], %s503
      %s505 = sshll.u32 [#allocation7], 4
      %s506 = int_to_ptr.vmem [resolvable:$true] %s505
      %511 = dma.vmem_to_hbm [thread:$0]  %s506, 1024, %s4, [#allocation4], 64, 64, 4
    $region29: #{tpu_custom_call.1} parent=1 // pred_fallthru
      _
    // Predicated region
    $region30: #{tpu_custom_call.1} parent=1 // pred_check
      _
    $region31: #{tpu_custom_call.1} parent=1 // pred_check_branch
      %513 = sbr.rel (0) target = $region33
    $region32: #{tpu_custom_call.1} parent=1 // pred_region
      _
    $region33: #{tpu_custom_call.1} parent=1 // pred_fallthru
      _
    // Predicated region
    $region34: #{tpu_custom_call.1} parent=1 // pred_check
      _
    $region35: #{tpu_custom_call.1} parent=1 // pred_check_branch
      %515 = sbr.rel (0) target = $region37
    $region36: #{tpu_custom_call.1} parent=1 // pred_region
      %s517 = ssub.s32 16, 16
      %518 = vsyncadd [#allocation9], %s517
      %s520 = sshll.u32 [#allocation8], 4
      %s521 = int_to_ptr.vmem [resolvable:$true] %s520
      %523 = dma.vmem_to_hbm [thread:$0]  %s521, 16, %s6, [#allocation9]
    $region37: #{tpu_custom_call.1} parent=1 // pred_fallthru
      _
    // Predicated region
    $region38: #{tpu_custom_call.1} parent=1 // pred_check
      _
    $region39: #{tpu_custom_call.1} parent=1 // pred_check_branch
      %525 = sbr.rel (0) target = $region41
    $region40: #{tpu_custom_call.1} parent=1 // pred_region
      %526 = dma.done [#allocation4], 1024
    $region41: #{tpu_custom_call.1} parent=1 // pred_fallthru
      _
    // Predicated region
    $region42: #{tpu_custom_call.1} parent=1 // pred_check
      _
    $region43: #{tpu_custom_call.1} parent=1 // pred_check_branch
      %528 = sbr.rel (0) target = $region45
    $region44: #{tpu_custom_call.1} parent=1 // pred_region
      _
    $region45: #{tpu_custom_call.1} parent=1 // pred_fallthru
      _
    // Predicated region
    $region46: #{tpu_custom_call.1} parent=1 // pred_check
      _
    $region47: #{tpu_custom_call.1} parent=1 // pred_check_branch
      %530 = sbr.rel (0) target = $region49
    $region48: #{tpu_custom_call.1} parent=1 // pred_region
      %531 = dma.done [#allocation9], 16
    $region49: #{tpu_custom_call.1} parent=1 // pred_fallthru
      _
    %532 = vsyncpa [#allocation3], 1
    %533 = vsyncpa [#allocation6], 1
    %534 = vsyncpa [#allocation4], 1
    %535 = vsyncpa [#allocation9], 1

</llo_original>
